<compile_context>
chip_gen: v7x
topology: tpu7x:2x2x1
jax: 0.10.0
libtpu: 0.0.40
codegen_flags: <defaults>
</compile_context>

<pallas_src>
import functools

import jax
import jax.numpy as jnp
from jax.experimental import pallas as pl
from jax.experimental.pallas import tpu as pltpu


def _pos_enc_kernel(pos_ref, onehot_ref, freq_ref, phase_ref, *rest, scale, has_mask):
    # pos_ref:    (rows, P)   f32  P consecutive positions per output row
    # onehot_ref: (P, 128)    f32  replication matrix  W[i, l] = (l // E == i)
    # freq_ref:   (1, 128)    f32  per-lane inverse divisor
    # phase_ref:  (1, 128)    f32  0 on sin lanes, pi/2 on cos lanes
    # mask_ref:   (rows, P)   f32  per-position mask (only when has_mask)
    # out_ref:    (rows, 128) lane-dense view of the row-major (rows*P, E) output slab
    if has_mask:
        mask_ref, out_ref = rest
    else:
        (out_ref,) = rest

    # Lane-replicate the P positions of each output row across their E lanes using a
    # one-hot matmul on the (otherwise idle) MXU; HIGHEST precision keeps it exact f32.
    pos_rep = jnp.dot(pos_ref[...], onehot_ref[...],
                      preferred_element_type=jnp.float32,
                      precision=jax.lax.Precision.HIGHEST)          # (rows, 128)

    # cos(x) = sin(x + pi/2): one full-width EUP pass, no concat / lane shuffle.
    pre = pos_rep * freq_ref[...] + phase_ref[...]
    enc = jnp.sin(pre)

    if scale != 1.0:                       # constant-folded L2 normalization
        enc = enc * scale
    if has_mask:
        msk = jnp.dot(mask_ref[...], onehot_ref[...],
                      preferred_element_type=jnp.float32,
                      precision=jax.lax.Precision.HIGHEST)
        enc = enc * msk

    out_ref[...] = enc.astype(out_ref.dtype)


def _round_up(x, m):
    return ((x + m - 1) // m) * m


def positional_encoding(positions, mask=None, *, encoding_dim=16, position_dim=1,
                        max_frequency=10000.0, normalize=True,
                        block_rows=8192, out_dtype=jnp.float32):
    assert positions.ndim == 3
    N, T, D = positions.shape
    assert D == position_dim == 1
    E = encoding_dim
    assert E % position_dim == 0
    assert (E // position_dim) % 2 == 0
    # TODO(synk): add a lane-sparse fallback for encoding_dim values that do not divide 128.
    assert 128 % E == 0, "lane-dense kernel requires encoding_dim to divide 128"

    half = E // 2
    P = 128 // E            # positions packed per 128-lane output row
    unit = 8 * P            # rows per full (8, 128) output vreg tile

    # ---- constant lane tables (plain JAX glue, built once) ---------------------------
    exps = jnp.arange(0, E, 2, dtype=jnp.float32)                            # (half,)
    inv_div = 1.0 / jnp.power(jnp.float32(max_frequency), exps / jnp.float32(E))
    freq_row = jnp.tile(jnp.concatenate([inv_div, inv_div]), P)[None, :]     # (1, 128)
    phase_row = jnp.tile(
        jnp.concatenate([jnp.zeros((half,), jnp.float32),
                         jnp.full((half,), jnp.pi / 2, jnp.float32)]), P)[None, :]
    onehot = (jax.lax.broadcasted_iota(jnp.int32, (P, 128), 1) // E ==
              jax.lax.broadcasted_iota(jnp.int32, (P, 128), 0)).astype(jnp.float32)

    # ---- tiling over M = N*T rows ------------------------------------------------------
    M = N * T
    block_rows = max(unit, (block_rows // unit) * unit)
    Mp = _round_up(M, unit)
    if Mp <= block_rows:
        TM = Mp
    else:
        TM = block_rows
        Mp = _round_up(M, TM)
    grid = (Mp // TM,)

    pos_flat = jnp.pad(positions.reshape(M).astype(jnp.float32), (0, Mp - M))
    pos2d = pos_flat.reshape(Mp // P, P)

    has_mask = mask is not None
    inputs = [pos2d, onehot, freq_row, phase_row]
    in_specs = [
        pl.BlockSpec((TM // P, P), lambda i: (i, 0)),
        pl.BlockSpec((P, 128), lambda i: (0, 0)),
        pl.BlockSpec((1, 128), lambda i: (0, 0)),
        pl.BlockSpec((1, 128), lambda i: (0, 0)),
    ]
    if has_mask:
        mask_flat = jnp.pad(mask.reshape(M).astype(jnp.float32), (0, Mp - M))
        inputs.append(mask_flat.reshape(Mp // P, P))
        in_specs.append(pl.BlockSpec((TM // P, P), lambda i: (i, 0)))

    scale = float(1.0 / (half ** 0.5)) if normalize else 1.0
    kernel = functools.partial(_pos_enc_kernel, scale=scale, has_mask=has_mask)

    out = pl.pallas_call(
        kernel,
        out_shape=jax.ShapeDtypeStruct((Mp // P, 128), out_dtype),
        grid=grid,
        in_specs=in_specs,
        out_specs=pl.BlockSpec((TM // P, 128), lambda i: (i, 0)),
        compiler_params=pltpu.CompilerParams(
            dimension_semantics=("parallel",)),
    )(*inputs)

    # (Mp // P, 128) is bitwise identical to row-major (Mp, E): the reshape is a view.
    return out.reshape(Mp, E)[:M].reshape(N, T, E)


def _reference(positions, mask, encoding_dim=16, max_frequency=10000.0, normalize=True):
    N, T, D = positions.shape
    enc_per_dim = encoding_dim // D
    exps = jnp.arange(0, enc_per_dim, 2, dtype=jnp.float32)
    divisors = jnp.power(jnp.float32(max_frequency), exps / enc_per_dim)[None, None, None, :]
    pre = positions[:, :, :, None] / divisors
    post = jnp.concatenate([jnp.sin(pre), jnp.cos(pre)], axis=-1)
    enc = post.reshape(N, T, encoding_dim)
    if normalize:
        enc = enc / jnp.linalg.norm(enc, axis=-1, keepdims=True)
    if mask is not None:
        enc = enc * mask[:, :, None]
    return enc


if __name__ == "__main__":
    key = jax.random.PRNGKey(0)
    k1, k2 = jax.random.split(key)

    N, T, D = 2, 60, 1
    encoding_dim = 16

    positions = jax.random.uniform(k1, (N, T, D), dtype=jnp.float32) * 100.0
    mask = (jax.random.uniform(k2, (N, T)) > 0.3).astype(jnp.float32)

    # 1) masked + normalized, small tile to exercise a multi-step grid and row padding.
    out_masked = positional_encoding(positions, mask, encoding_dim=encoding_dim,
                                     max_frequency=10000.0, normalize=True,
                                     block_rows=64)
    out_masked = jax.block_until_ready(out_masked)
    ref_masked = _reference(positions, mask, encoding_dim=encoding_dim,
                            max_frequency=10000.0, normalize=True)
    assert out_masked.shape == (N, T, encoding_dim)
    assert jnp.allclose(out_masked, ref_masked, atol=1e-5, rtol=1e-5)

    # 2) unmasked + unnormalized, default (large) tile: single-step grid, no mask stream.
    out_plain = positional_encoding(positions, None, encoding_dim=encoding_dim,
                                    max_frequency=10000.0, normalize=False)
    out_plain = jax.block_until_ready(out_plain)
    ref_plain = _reference(positions, None, encoding_dim=encoding_dim,
                           max_frequency=10000.0, normalize=False)
    assert out_plain.shape == (N, T, encoding_dim)
    assert jnp.allclose(out_plain, ref_plain, atol=1e-5, rtol=1e-5)

    print("KERNEL_OK")
</pallas_src>

<mosaic_0001>
module attributes {stable_mosaic.version = 11 : i64} {
  func.func @_pos_enc_kernel(%arg0: i32, %arg1: memref<8x8xf32, #tpu.memory_space<vmem>>, %arg2: memref<8x128xf32, #tpu.memory_space<vmem>>, %arg3: memref<1x128xf32, #tpu.memory_space<vmem>>, %arg4: memref<1x128xf32, #tpu.memory_space<vmem>>, %arg5: memref<8x8xf32, #tpu.memory_space<vmem>>, %arg6: memref<8x128xf32, #tpu.memory_space<vmem>>) attributes {dimension_semantics = [#tpu.dimension_semantics<parallel>], iteration_bounds = array<i64: 2>, scalar_prefetch = 0 : i64, scratch_operands = 0 : i64, tpu.core_type = #tpu.core_type<tc>, window_params = [{transform_indices = @transform_0, window_bounds = array<i64: 8, 8>}, {pipeline_mode = #tpu.pipeline_mode<synchronous>, transform_indices = @transform_1, window_bounds = array<i64: 8, 128>}, {pipeline_mode = #tpu.pipeline_mode<synchronous>, transform_indices = @transform_2, window_bounds = array<i64: 1, 128>}, {pipeline_mode = #tpu.pipeline_mode<synchronous>, transform_indices = @transform_3, window_bounds = array<i64: 1, 128>}, {transform_indices = @transform_4, window_bounds = array<i64: 8, 8>}, {transform_indices = @transform_5, window_bounds = array<i64: 8, 128>}]} {
    %c0 = arith.constant 0 : index
    %c0_0 = arith.constant 0 : index
    %0 = vector.load %arg1[%c0, %c0_0] : memref<8x8xf32, #tpu.memory_space<vmem>>, vector<8x8xf32>
    %c0_1 = arith.constant 0 : index
    %c0_2 = arith.constant 0 : index
    %1 = vector.load %arg2[%c0_1, %c0_2] : memref<8x128xf32, #tpu.memory_space<vmem>>, vector<8x128xf32>
    %cst = arith.constant dense<0.000000e+00> : vector<8x128xf32>
    %2 = tpu.matmul %0, %1, %cst {dimension_numbers = #tpu.dot_dimension_numbers<[1], [0], [0], [1], [0, 0, 1, 1], [], []>, precision = #tpu.contract_precision<fp32>} : vector<8x8xf32>, vector<8x128xf32>, vector<8x128xf32> -> vector<8x128xf32>
    %c0_3 = arith.constant 0 : index
    %c0_4 = arith.constant 0 : index
    %3 = vector.load %arg3[%c0_3, %c0_4] : memref<1x128xf32, #tpu.memory_space<vmem>>, vector<1x128xf32>
    %4 = vector.broadcast %3 : vector<1x128xf32> to vector<8x128xf32>
    %5 = arith.mulf %2, %4 : vector<8x128xf32>
    %c0_5 = arith.constant 0 : index
    %c0_6 = arith.constant 0 : index
    %6 = vector.load %arg4[%c0_5, %c0_6] : memref<1x128xf32, #tpu.memory_space<vmem>>, vector<1x128xf32>
    %7 = vector.broadcast %6 : vector<1x128xf32> to vector<8x128xf32>
    %8 = arith.addf %5, %7 : vector<8x128xf32>
    %9 = math.sin %8 : vector<8x128xf32>
    %cst_7 = arith.constant 0.353553385 : f32
    %10 = vector.broadcast %cst_7 : f32 to vector<8x128xf32>
    %11 = arith.mulf %9, %10 : vector<8x128xf32>
    %c0_8 = arith.constant 0 : index
    %c0_9 = arith.constant 0 : index
    %12 = vector.load %arg5[%c0_8, %c0_9] : memref<8x8xf32, #tpu.memory_space<vmem>>, vector<8x8xf32>
    %c0_10 = arith.constant 0 : index
    %c0_11 = arith.constant 0 : index
    %13 = vector.load %arg2[%c0_10, %c0_11] : memref<8x128xf32, #tpu.memory_space<vmem>>, vector<8x128xf32>
    %cst_12 = arith.constant dense<0.000000e+00> : vector<8x128xf32>
    %14 = tpu.matmul %12, %13, %cst_12 {dimension_numbers = #tpu.dot_dimension_numbers<[1], [0], [0], [1], [0, 0, 1, 1], [], []>, precision = #tpu.contract_precision<fp32>} : vector<8x8xf32>, vector<8x128xf32>, vector<8x128xf32> -> vector<8x128xf32>
    %15 = arith.mulf %11, %14 : vector<8x128xf32>
    %c0_13 = arith.constant 0 : index
    %c0_14 = arith.constant 0 : index
    %16 = vector.load %arg6[%c0_13, %c0_14] : memref<8x128xf32, #tpu.memory_space<vmem>>, vector<8x128xf32>
    tpu.vector_store %arg6[%c0_13, %c0_14], %15 {strides = array<i32>} : memref<8x128xf32, #tpu.memory_space<vmem>>, vector<8x128xf32>,
    return
  }
  func.func @transform_0(%arg0: i32) -> (i32, i32) {
    %c0_i32 = arith.constant 0 : i32
    %c0_i32_0 = arith.constant 0 : i32
    return %arg0, %c0_i32 : i32, i32
  }
  func.func @transform_1(%arg0: i32) -> (i32, i32) {
    %c0_i32 = arith.constant 0 : i32
    %c0_i32_0 = arith.constant 0 : i32
    %c0_i32_1 = arith.constant 0 : i32
    return %c0_i32, %c0_i32_0 : i32, i32
  }
  func.func @transform_2(%arg0: i32) -> (i32, i32) {
    %c0_i32 = arith.constant 0 : i32
    %c0_i32_0 = arith.constant 0 : i32
    %c0_i32_1 = arith.constant 0 : i32
    return %c0_i32, %c0_i32_0 : i32, i32
  }
  func.func @transform_3(%arg0: i32) -> (i32, i32) {
    %c0_i32 = arith.constant 0 : i32
    %c0_i32_0 = arith.constant 0 : i32
    %c0_i32_1 = arith.constant 0 : i32
    return %c0_i32, %c0_i32_0 : i32, i32
  }
  func.func @transform_4(%arg0: i32) -> (i32, i32) {
    %c0_i32 = arith.constant 0 : i32
    %c0_i32_0 = arith.constant 0 : i32
    return %arg0, %c0_i32 : i32, i32
  }
  func.func @transform_5(%arg0: i32) -> (i32, i32) {
    %c0_i32 = arith.constant 0 : i32
    %c0_i32_0 = arith.constant 0 : i32
    return %arg0, %c0_i32 : i32, i32
  }
}

</mosaic_0001>

<llo_original>
// kernel: tpu_custom_call.1
$region0: #{tpu_custom_call.1}
  #allocation0 [shape = 'u32[]', space=smem, size = 0x4, offset = 0x4, fixed_abs, tag = 'smem constant byte address 0x4 - core index']
  #allocation1 [shape = 'u32[144,128]{1,0:T(1,128)}', space=vmem, size = 0x12000, scoped, tag = 'internal scratch']
  %s0 = inlined_call_operand.vmem [shape: f32[16,8], index: 0, kind: input, shape index: {}]
  %s1 = inlined_call_operand.vmem [shape: f32[8,128], index: 1, kind: input, shape index: {}]
  %s2 = inlined_call_operand.vmem [shape: f32[1,128], index: 2, kind: input, shape index: {}]
  %s3 = inlined_call_operand.vmem [shape: f32[1,128], index: 3, kind: input, shape index: {}]
  %s4 = inlined_call_operand.vmem [shape: f32[16,8], index: 4, kind: input, shape index: {}]
  %s5 = inlined_call_operand.hbm [shape: f32[16,128], index: 5, kind: output, shape index: {}]
  %s6 = sld [smem:[#allocation0]]
  $region53: #{tpu_custom_call.1} parent=0
    _
  %s8 = ssub.s32 1, %s6
  %s9 = scalar_select 0, %s8, %s6
  $region1: #{tpu_custom_call.1} parent=0
    #allocation2 [shape = 'u8[8192]{0}', space=vmem, size = 0x2000, scoped, tag = 'output window, operand 0']
    #allocation3 [shape = 's32[2]{0}', space=sflag, size = 0x8, scoped, tag = 'scoped memory for tpu_custom_call.1']
    %10 = vsyncpa [#allocation3], 0
    %s11 = scalar_lea.sflag [#allocation3], 1
    %12 = vsyncpa %s11, 0
    loop: start=0, step=1, limit=4
    $region2: #{tpu_custom_call.1} parent=1 // loop_pre_header
      _
    $region3: #{tpu_custom_call.1} parent=1 // loop_header
      %s14 = sphi 0, %s18
      %p15 = scmp.ge.s32.totalorder %s14, 4
      %s24 = sphi 0, %s26
      %s27 = sphi 0, %s24
      %s28 = sphi 0, %s27
      %s44 = sphi 0, %s28
      %s48 = sphi 0, %s48
      %s50 = sphi 0, %s48
      %s51 = sphi 0, %s50
      %s65 = sphi 0, %s51
      %s69 = sphi 0, %s69
      %s71 = sphi 0, %s69
      %s72 = sphi 0, %s71
      %s86 = sphi 0, %s72
      %s90 = sphi 0, %s90
      %s92 = sphi 0, %s90
      %s93 = sphi 0, %s92
      %s107 = sphi 0, %s93
      %s113 = sphi 0, %s115
      %s116 = sphi 0, %s113
      %s117 = sphi 0, %s116
      %s133 = sphi 0, %s117
      %s139 = sphi 0, %s141
      %s142 = sphi 0, %s139
      %s143 = sphi 0, %s142
      %s159 = sphi 0, %s143
    $region4: #{tpu_custom_call.1} parent=1 // loop_header_branch
      %17 = sbr.rel (%p15) target = $region8
    $region5: #{tpu_custom_call.1} parent=1 // loop_body
      %s19 = ssub.s32 %s14, 1
      %s20 = ssub.s32 %s14, 2
      %s21 = sadd.s32 %s14, 1
      %s22 = ssub.s32 %s14, %s21
      %p23 = scmp.eq.s32.totalorder %s22, 0
      %s25 = sadd.s32 %s24, 1
      %s26 = scalar_select %p23, %s24, %s25
      %p29 = pneg %p23
      %p30 = scmp.eq.s32.totalorder %s14, 1
      %p31 = por %p29, %p30
      %p32 = scmp.ne.s32.totalorder %s24, %s27
      %p33 = scmp.eq.s32.totalorder %s14, 0
      %p34 = por %p32, %p33
      %p35 = scmp.ne.s32.totalorder %s24, %s27
      %p36 = scmp.eq.s32.totalorder %s19, 1
      %p37 = por %p35, %p36
      %p38 = scmp.ne.s32.totalorder %s27, %s28
      %p39 = scmp.eq.s32.totalorder %s19, 0
      %p40 = por %p38, %p39
      %p41 = scmp.ne.s32.totalorder %s27, %s28
      %p42 = scmp.eq.s32.totalorder %s20, 1
      %p43 = por %p41, %p42
      %p45 = scmp.ne.s32.totalorder %s28, %s44
      %p46 = scmp.eq.s32.totalorder %s20, 0
      %p47 = por %p45, %p46
      %s49 = sadd.s32 %s48, 1
      %p52 = scmp.eq.s32.totalorder %s14, 1
      %p53 = scmp.ne.s32.totalorder %s48, %s50
      %p54 = scmp.eq.s32.totalorder %s14, 0
      %p55 = por %p53, %p54
      %p56 = scmp.ne.s32.totalorder %s48, %s50
      %p57 = scmp.eq.s32.totalorder %s19, 1
      %p58 = por %p56, %p57
      %p59 = scmp.ne.s32.totalorder %s50, %s51
      %p60 = scmp.eq.s32.totalorder %s19, 0
      %p61 = por %p59, %p60
      %p62 = scmp.ne.s32.totalorder %s50, %s51
      %p63 = scmp.eq.s32.totalorder %s20, 1
      %p64 = por %p62, %p63
      %p66 = scmp.ne.s32.totalorder %s51, %s65
      %p67 = scmp.eq.s32.totalorder %s20, 0
      %p68 = por %p66, %p67
      %s70 = sadd.s32 %s69, 1
      %p73 = scmp.eq.s32.totalorder %s14, 1
      %p74 = scmp.ne.s32.totalorder %s69, %s71
      %p75 = scmp.eq.s32.totalorder %s14, 0
      %p76 = por %p74, %p75
      %p77 = scmp.ne.s32.totalorder %s69, %s71
      %p78 = scmp.eq.s32.totalorder %s19, 1
      %p79 = por %p77, %p78
      %p80 = scmp.ne.s32.totalorder %s71, %s72
      %p81 = scmp.eq.s32.totalorder %s19, 0
      %p82 = por %p80, %p81
      %p83 = scmp.ne.s32.totalorder %s71, %s72
      %p84 = scmp.eq.s32.totalorder %s20, 1
      %p85 = por %p83, %p84
      %p87 = scmp.ne.s32.totalorder %s72, %s86
      %p88 = scmp.eq.s32.totalorder %s20, 0
      %p89 = por %p87, %p88
      %s91 = sadd.s32 %s90, 1
      %p94 = scmp.eq.s32.totalorder %s14, 1
      %p95 = scmp.ne.s32.totalorder %s90, %s92
      %p96 = scmp.eq.s32.totalorder %s14, 0
      %p97 = por %p95, %p96
      %p98 = scmp.ne.s32.totalorder %s90, %s92
      %p99 = scmp.eq.s32.totalorder %s19, 1
      %p100 = por %p98, %p99
      %p101 = scmp.ne.s32.totalorder %s92, %s93
      %p102 = scmp.eq.s32.totalorder %s19, 0
      %p103 = por %p101, %p102
      %p104 = scmp.ne.s32.totalorder %s92, %s93
      %p105 = scmp.eq.s32.totalorder %s20, 1
      %p106 = por %p104, %p105
      %p108 = scmp.ne.s32.totalorder %s93, %s107
      %p109 = scmp.eq.s32.totalorder %s20, 0
      %p110 = por %p108, %p109
      %s111 = ssub.s32 %s14, %s21
      %p112 = scmp.eq.s32.totalorder %s111, 0
      %s114 = sadd.s32 %s113, 1
      %s115 = scalar_select %p112, %s113, %s114
      %p118 = pneg %p112
      %p119 = scmp.eq.s32.totalorder %s14, 1
      %p120 = por %p118, %p119
      %p121 = scmp.ne.s32.totalorder %s113, %s116
      %p122 = scmp.eq.s32.totalorder %s14, 0
      %p123 = por %p121, %p122
      %p124 = scmp.ne.s32.totalorder %s113, %s116
      %p125 = scmp.eq.s32.totalorder %s19, 1
      %p126 = por %p124, %p125
      %p127 = scmp.ne.s32.totalorder %s116, %s117
      %p128 = scmp.eq.s32.totalorder %s19, 0
      %p129 = por %p127, %p128
      %p130 = scmp.ne.s32.totalorder %s116, %s117
      %p131 = scmp.eq.s32.totalorder %s20, 1
      %p132 = por %p130, %p131
      %p134 = scmp.ne.s32.totalorder %s117, %s133
      %p135 = scmp.eq.s32.totalorder %s20, 0
      %p136 = por %p134, %p135
      %s137 = ssub.s32 %s14, %s21
      %p138 = scmp.eq.s32.totalorder %s137, 0
      %s140 = sadd.s32 %s139, 1
      %s141 = scalar_select %p138, %s139, %s140
      %p144 = pneg %p138
      %p145 = scmp.eq.s32.totalorder %s14, 1
      %p146 = por %p144, %p145
      %p147 = scmp.ne.s32.totalorder %s139, %s142
      %p148 = scmp.eq.s32.totalorder %s14, 0
      %p149 = por %p147, %p148
      %p150 = scmp.ne.s32.totalorder %s139, %s142
      %p151 = scmp.eq.s32.totalorder %s19, 1
      %p152 = por %p150, %p151
      %p153 = scmp.ne.s32.totalorder %s142, %s143
      %p154 = scmp.eq.s32.totalorder %s19, 0
      %p155 = por %p153, %p154
      %p156 = scmp.ne.s32.totalorder %s142, %s143
      %p157 = scmp.eq.s32.totalorder %s20, 1
      %p158 = por %p156, %p157
      %p160 = scmp.ne.s32.totalorder %s143, %s159
      %p161 = scmp.eq.s32.totalorder %s20, 0
      %p162 = por %p160, %p161
      %p163 = scmp.le.s32.totalorder 1, %s14
      %p164 = scmp.lt.s32.totalorder %s14, 3
      %p165 = pnand %p163, %p164
      %p166 = pneg %p165
      // Predicated region
      $region9: #{tpu_custom_call.1} parent=5 // pred_check
        _
      $region10: #{tpu_custom_call.1} parent=5 // pred_check_branch
        %168 = sbr.rel (%p165) target = $region12
      $region11: #{tpu_custom_call.1} parent=5 // pred_region
        %s169 = ssub.s32 %s14, 1
        // Predicated region
        $region13: #{tpu_custom_call.1} parent=11 // pred_check
          %p170 = pneg %p61
        $region14: #{tpu_custom_call.1} parent=11 // pred_check_branch
          %172 = sbr.rel (%p170) target = $region16
        $region15: #{tpu_custom_call.1} parent=11 // pred_region
          _
        $region16: #{tpu_custom_call.1} parent=11 // pred_fallthru
          _
        // Predicated region
        $region17: #{tpu_custom_call.1} parent=11 // pred_check
          %p173 = pneg %p82
        $region18: #{tpu_custom_call.1} parent=11 // pred_check_branch
          %175 = sbr.rel (%p173) target = $region20
        $region19: #{tpu_custom_call.1} parent=11 // pred_region
          _
        $region20: #{tpu_custom_call.1} parent=11 // pred_fallthru
          _
        // Predicated region
        $region21: #{tpu_custom_call.1} parent=11 // pred_check
          %p176 = pneg %p103
        $region22: #{tpu_custom_call.1} parent=11 // pred_check_branch
          %178 = sbr.rel (%p176) target = $region24
        $region23: #{tpu_custom_call.1} parent=11 // pred_region
          _
        $region24: #{tpu_custom_call.1} parent=11 // pred_fallthru
          _
      $region12: #{tpu_custom_call.1} parent=5 // pred_fallthru
        _
      %p179 = scmp.lt.s32.totalorder %s14, 2
      // Predicated region
      $region25: #{tpu_custom_call.1} parent=5 // pred_check
        %p180 = pneg %p179
      $region26: #{tpu_custom_call.1} parent=5 // pred_check_branch
        %182 = sbr.rel (%p180) target = $region28
      $region27: #{tpu_custom_call.1} parent=5 // pred_region
        // Predicated region
        $region29: #{tpu_custom_call.1} parent=27 // pred_check
          %p183 = pneg %p34
        $region30: #{tpu_custom_call.1} parent=27 // pred_check_branch
          %185 = sbr.rel (%p183) target = $region32
        $region31: #{tpu_custom_call.1} parent=27 // pred_region
          %p186 = scmp.lt.s32.totalorder %s14, 1
          %s187 = scalar_select %p186, %s14, 1
          %s188 = smul.addr %s187, 8
          %s189 = scalar_lea.vmem %s0, %s188
        $region32: #{tpu_custom_call.1} parent=27 // pred_fallthru
          _
        // Predicated region
        $region33: #{tpu_custom_call.1} parent=27 // pred_check
          %p190 = pneg %p123
        $region34: #{tpu_custom_call.1} parent=27 // pred_check_branch
          %192 = sbr.rel (%p190) target = $region36
        $region35: #{tpu_custom_call.1} parent=27 // pred_region
          %p193 = scmp.lt.s32.totalorder %s14, 1
          %s194 = scalar_select %p193, %s14, 1
          %s195 = smul.addr %s194, 8
          %s196 = scalar_lea.vmem %s4, %s195
        $region36: #{tpu_custom_call.1} parent=27 // pred_fallthru
          _
      $region28: #{tpu_custom_call.1} parent=5 // pred_fallthru
        _
      %p197 = scmp.le.s32.totalorder 1, %s14
      %p198 = scmp.lt.s32.totalorder %s14, 3
      %p199 = pnand %p197, %p198
      %p200 = pneg %p199
      // Predicated region
      $region37: #{tpu_custom_call.1} parent=5 // pred_check
        _
      $region38: #{tpu_custom_call.1} parent=5 // pred_check_branch
        %202 = sbr.rel (%p199) target = $region40
      $region39: #{tpu_custom_call.1} parent=5 // pred_region
        %s203 = ssub.s32 %s14, 1
        %p204 = scmp.lt.s32.totalorder %s19, 1
        %s205 = scalar_select %p204, %s19, 1
        %s206 = smul.addr %s205, 8
        %s207 = scalar_lea.vmem %s0, %s206
        %p208 = pneg %p40
        %p209 = pneg %p37
        %p210 = pneg %p61
        %p211 = pneg %p58
        %p212 = pneg %p82
        %p213 = pneg %p79
        %p214 = pneg %p103
        %p215 = pneg %p100
        %p216 = scmp.lt.s32.totalorder %s19, 1
        %s217 = scalar_select %p216, %s19, 1
        %s218 = smul.addr %s217, 8
        %s219 = scalar_lea.vmem %s4, %s218
        %p220 = pneg %p129
        %p221 = pneg %p126
        %p222 = pneg %p155
        %p223 = pneg %p152
        %s224 = sand.u32 %s142, 1
        %s225 = scalar_lea.sflag [#allocation3], %s224
        %s226 = sand.u32 %s142, 1
        %s227 = smul.addr %s226, 8
        %s228 = scalar_lea.vmem [#allocation2], %s227
        %p229 = scmp.lt.s32.totalorder %s19, 1
        %s230 = scalar_select %p229, %s19, 1
        %s231 = smul.addr %s230, 8
        %s232 = scalar_lea.vmem %s0, %s231
        %p233 = scmp.lt.s32.totalorder %s19, 1
        %s234 = scalar_select %p233, %s19, 1
        %s235 = smul.addr %s234, 8
        %s236 = scalar_lea.vmem %s4, %s235
        %v237 = vld [vmem:[%s232] sm:$0xff]
        %v238 = vld [vmem:[%s1] sm:$0xff]
        %vm239 = vcmask 64512
        %v241 = vsel %vm239, %v237, 0
        %243 = vmatprep.subr.mxu0 0.0
        %v244 = vand.u32 %v238, 4294901760
        %245 = vmatpush1.msra.mxu0 %v244
        %246 = vmatprep.subr.mxu0 0.0
        %247 = vmatpush1.msra.mxu0 0.0
        %248 = vmatprep.subr.mxu0 0.0
        %249 = vmatpush1.msra.mxu0 0.0
        %250 = vmatprep.subr.mxu0 0.0
        %251 = vmatpush1.msra.mxu0 0.0
        %252 = vmatprep.subr.mxu0 0.0
        %253 = vmatpush1.msra.mxu0 0.0
        %254 = vmatprep.subr.mxu0 0.0
        %255 = vmatpush1.msra.mxu0 0.0
        %256 = vmatprep.subr.mxu0 0.0
        %257 = vmatpush1.msra.mxu0 0.0
        %258 = vmatprep.subr.mxu0 0.0
        %259 = vmatpush1.msra.mxu0 0.0
        %260 = vmatprep.subr.mxu0 0.0
        %261 = vmatpush1.msra.mxu0 0.0
        %262 = vmatprep.subr.mxu0 0.0
        %263 = vmatpush1.msra.mxu0 0.0
        %264 = vmatprep.subr.mxu0 0.0
        %265 = vmatpush1.msra.mxu0 0.0
        %266 = vmatprep.subr.mxu0 0.0
        %267 = vmatpush1.msra.mxu0 0.0
        %268 = vmatprep.subr.mxu0 0.0
        %269 = vmatpush1.msra.mxu0 0.0
        %270 = vmatprep.subr.mxu0 0.0
        %271 = vmatpush1.msra.mxu0 0.0
        %272 = vmatprep.subr.mxu0 0.0
        %273 = vmatpush1.msra.mxu0 0.0
        %274 = vmatprep.subr.mxu0 0.0
        %275 = vmatpush1.msra.mxu0 0.0
        %276 = vmatprep.subr.mxu0 0.0
        %277 = vmatpush1.msra.mxu0 0.0
        %278 = vmatprep.subr.mxu0 0.0
        %279 = vmatpush1.msra.mxu0 0.0
        %280 = vmatprep.subr.mxu0 0.0
        %281 = vmatpush1.msra.mxu0 0.0
        %282 = vmatprep.subr.mxu0 0.0
        %283 = vmatpush1.msra.mxu0 0.0
        %284 = vmatprep.subr.mxu0 0.0
        %285 = vmatpush1.msra.mxu0 0.0
        %286 = vmatprep.subr.mxu0 0.0
        %287 = vmatpush1.msra.mxu0 0.0
        %288 = vmatprep.subr.mxu0 0.0
        %289 = vmatpush1.msra.mxu0 0.0
        %290 = vmatprep.subr.mxu0 0.0
        %291 = vmatpush1.msra.mxu0 0.0
        %292 = vmatprep.subr.mxu0 0.0
        %293 = vmatpush1.msra.mxu0 0.0
        %294 = vmatprep.subr.mxu0 0.0
        %295 = vmatpush1.msra.mxu0 0.0
        %296 = vmatprep.subr.mxu0 0.0
        %297 = vmatpush1.msra.mxu0 0.0
        %298 = vmatprep.subr.mxu0 0.0
        %299 = vmatpush1.msra.mxu0 0.0
        %300 = vmatprep.subr.mxu0 0.0
        %301 = vmatpush1.msra.mxu0 0.0
        %302 = vmatprep.subr.mxu0 0.0
        %303 = vmatpush1.msra.mxu0 0.0
        %304 = vmatprep.subr.mxu0 0.0
        %305 = vmatpush1.msra.mxu0 0.0
        %306 = vmatprep.subr.mxu0 0.0
        %307 = vmatpush1.msra.mxu0 0.0
        %308 = vmatprep.mubr.f32.mxu0 0.0
        %v309 = vand.u32 %v241, 4294901760
        %v310 = vsub.f32 %v241, %v309
        %v311 = vand.u32 %v310, 4294901760
        %v312 = vsub.f32 %v310, %v311
        %v313 = vand.u32 %v312, 4294901760
        %314 = vmatmul.mubr.f32.gmra.mrb[0].mxu0 %v313
        %v315 = vpop.f32.mrb[0].mxu0
        %v316 = vadd.f32 0.0, %v315
        %v317 = vpop.f32.mrb[0].mxu0
        %318 = vdwg.mxu0
        %319 = vmatprep.subr.mxu0 0.0
        %v320 = vand.u32 %v238, 4294901760
        %v321 = vsub.f32 %v238, %v320
        %v322 = vand.u32 %v321, 4294901760
        %v323 = vsub.f32 %v321, %v322
        %v324 = vand.u32 %v323, 4294901760
        %325 = vmatpush1.msra.mxu0 %v324
        %326 = vmatprep.subr.mxu0 0.0
        %327 = vmatpush1.msra.mxu0 0.0
        %328 = vmatprep.subr.mxu0 0.0
        %329 = vmatpush1.msra.mxu0 0.0
        %330 = vmatprep.subr.mxu0 0.0
        %331 = vmatpush1.msra.mxu0 0.0
        %332 = vmatprep.subr.mxu0 0.0
        %333 = vmatpush1.msra.mxu0 0.0
        %334 = vmatprep.subr.mxu0 0.0
        %335 = vmatpush1.msra.mxu0 0.0
        %336 = vmatprep.subr.mxu0 0.0
        %337 = vmatpush1.msra.mxu0 0.0
        %338 = vmatprep.subr.mxu0 0.0
        %339 = vmatpush1.msra.mxu0 0.0
        %340 = vmatprep.subr.mxu0 0.0
        %341 = vmatpush1.msra.mxu0 0.0
        %342 = vmatprep.subr.mxu0 0.0
        %343 = vmatpush1.msra.mxu0 0.0
        %344 = vmatprep.subr.mxu0 0.0
        %345 = vmatpush1.msra.mxu0 0.0
        %346 = vmatprep.subr.mxu0 0.0
        %347 = vmatpush1.msra.mxu0 0.0
        %348 = vmatprep.subr.mxu0 0.0
        %349 = vmatpush1.msra.mxu0 0.0
        %350 = vmatprep.subr.mxu0 0.0
        %351 = vmatpush1.msra.mxu0 0.0
        %352 = vmatprep.subr.mxu0 0.0
        %353 = vmatpush1.msra.mxu0 0.0
        %354 = vmatprep.subr.mxu0 0.0
        %355 = vmatpush1.msra.mxu0 0.0
        %356 = vmatprep.subr.mxu0 0.0
        %357 = vmatpush1.msra.mxu0 0.0
        %358 = vmatprep.subr.mxu0 0.0
        %359 = vmatpush1.msra.mxu0 0.0
        %360 = vmatprep.subr.mxu0 0.0
        %361 = vmatpush1.msra.mxu0 0.0
        %362 = vmatprep.subr.mxu0 0.0
        %363 = vmatpush1.msra.mxu0 0.0
        %364 = vmatprep.subr.mxu0 0.0
        %365 = vmatpush1.msra.mxu0 0.0
        %366 = vmatprep.subr.mxu0 0.0
        %367 = vmatpush1.msra.mxu0 0.0
        %368 = vmatprep.subr.mxu0 0.0
        %369 = vmatpush1.msra.mxu0 0.0
        %370 = vmatprep.subr.mxu0 0.0
        %371 = vmatpush1.msra.mxu0 0.0
        %372 = vmatprep.subr.mxu0 0.0
        %373 = vmatpush1.msra.mxu0 0.0
        %374 = vmatprep.subr.mxu0 0.0
        %375 = vmatpush1.msra.mxu0 0.0
        %376 = vmatprep.subr.mxu0 0.0
        %377 = vmatpush1.msra.mxu0 0.0
        %378 = vmatprep.subr.mxu0 0.0
        %379 = vmatpush1.msra.mxu0 0.0
        %380 = vmatprep.subr.mxu0 0.0
        %381 = vmatpush1.msra.mxu0 0.0
        %382 = vmatprep.subr.mxu0 0.0
        %383 = vmatpush1.msra.mxu0 0.0
        %384 = vmatprep.subr.mxu0 0.0
        %385 = vmatpush1.msra.mxu0 0.0
        %386 = vmatprep.subr.mxu0 0.0
        %387 = vmatpush1.msra.mxu0 0.0
        %388 = vmatprep.mubr.f32.mxu0 0.0
        %v389 = vand.u32 %v241, 4294901760
        %390 = vmatmul.mubr.f32.gmra.mrb[0].mxu0 %v389
        %v391 = vpop.f32.mrb[0].mxu0
        %v392 = vadd.f32 %v316, %v391
        %v393 = vpop.f32.mrb[0].mxu0
        %394 = vdwg.mxu0
        %395 = vmatprep.subr.mxu0 0.0
        %v396 = vand.u32 %v238, 4294901760
        %v397 = vsub.f32 %v238, %v396
        %398 = vmatpush1.msra.mxu0 %v397
        %399 = vmatprep.subr.mxu0 0.0
        %400 = vmatpush1.msra.mxu0 0.0
        %401 = vmatprep.subr.mxu0 0.0
        %402 = vmatpush1.msra.mxu0 0.0
        %403 = vmatprep.subr.mxu0 0.0
        %404 = vmatpush1.msra.mxu0 0.0
        %405 = vmatprep.subr.mxu0 0.0
        %406 = vmatpush1.msra.mxu0 0.0
        %407 = vmatprep.subr.mxu0 0.0
        %408 = vmatpush1.msra.mxu0 0.0
        %409 = vmatprep.subr.mxu0 0.0
        %410 = vmatpush1.msra.mxu0 0.0
        %411 = vmatprep.subr.mxu0 0.0
        %412 = vmatpush1.msra.mxu0 0.0
        %413 = vmatprep.subr.mxu0 0.0
        %414 = vmatpush1.msra.mxu0 0.0
        %415 = vmatprep.subr.mxu0 0.0
        %416 = vmatpush1.msra.mxu0 0.0
        %417 = vmatprep.subr.mxu0 0.0
        %418 = vmatpush1.msra.mxu0 0.0
        %419 = vmatprep.subr.mxu0 0.0
        %420 = vmatpush1.msra.mxu0 0.0
        %421 = vmatprep.subr.mxu0 0.0
        %422 = vmatpush1.msra.mxu0 0.0
        %423 = vmatprep.subr.mxu0 0.0
        %424 = vmatpush1.msra.mxu0 0.0
        %425 = vmatprep.subr.mxu0 0.0
        %426 = vmatpush1.msra.mxu0 0.0
        %427 = vmatprep.subr.mxu0 0.0
        %428 = vmatpush1.msra.mxu0 0.0
        %429 = vmatprep.subr.mxu0 0.0
        %430 = vmatpush1.msra.mxu0 0.0
        %431 = vmatprep.subr.mxu0 0.0
        %432 = vmatpush1.msra.mxu0 0.0
        %433 = vmatprep.subr.mxu0 0.0
        %434 = vmatpush1.msra.mxu0 0.0
        %435 = vmatprep.subr.mxu0 0.0
        %436 = vmatpush1.msra.mxu0 0.0
        %437 = vmatprep.subr.mxu0 0.0
        %438 = vmatpush1.msra.mxu0 0.0
        %439 = vmatprep.subr.mxu0 0.0
        %440 = vmatpush1.msra.mxu0 0.0
        %441 = vmatprep.subr.mxu0 0.0
        %442 = vmatpush1.msra.mxu0 0.0
        %443 = vmatprep.subr.mxu0 0.0
        %444 = vmatpush1.msra.mxu0 0.0
        %445 = vmatprep.subr.mxu0 0.0
        %446 = vmatpush1.msra.mxu0 0.0
        %447 = vmatprep.subr.mxu0 0.0
        %448 = vmatpush1.msra.mxu0 0.0
        %449 = vmatprep.subr.mxu0 0.0
        %450 = vmatpush1.msra.mxu0 0.0
        %451 = vmatprep.subr.mxu0 0.0
        %452 = vmatpush1.msra.mxu0 0.0
        %453 = vmatprep.subr.mxu0 0.0
        %454 = vmatpush1.msra.mxu0 0.0
        %455 = vmatprep.subr.mxu0 0.0
        %456 = vmatpush1.msra.mxu0 0.0
        %457 = vmatprep.subr.mxu0 0.0
        %458 = vmatpush1.msra.mxu0 0.0
        %459 = vmatprep.subr.mxu0 0.0
        %460 = vmatpush1.msra.mxu0 0.0
        %461 = vmatprep.mubr.f32.mxu0 0.0
        %v462 = vand.u32 %v241, 4294901760
        %v463 = vsub.f32 %v241, %v462
        %464 = vmatmul.mubr.f32.gmra.mrb[0].mxu0 %v463
        %v465 = vpop.f32.mrb[0].mxu0
        %v466 = vadd.f32 %v392, %v465
        %v467 = vpop.f32.mrb[0].mxu0
        %468 = vdwg.mxu0
        %469 = vmatprep.subr.mxu0 0.0
        %v470 = vand.u32 %v238, 4294901760
        %471 = vmatpush1.msra.mxu0 %v470
        %472 = vmatprep.subr.mxu0 0.0
        %473 = vmatpush1.msra.mxu0 0.0
        %474 = vmatprep.subr.mxu0 0.0
        %475 = vmatpush1.msra.mxu0 0.0
        %476 = vmatprep.subr.mxu0 0.0
        %477 = vmatpush1.msra.mxu0 0.0
        %478 = vmatprep.subr.mxu0 0.0
        %479 = vmatpush1.msra.mxu0 0.0
        %480 = vmatprep.subr.mxu0 0.0
        %481 = vmatpush1.msra.mxu0 0.0
        %482 = vmatprep.subr.mxu0 0.0
        %483 = vmatpush1.msra.mxu0 0.0
        %484 = vmatprep.subr.mxu0 0.0
        %485 = vmatpush1.msra.mxu0 0.0
        %486 = vmatprep.subr.mxu0 0.0
        %487 = vmatpush1.msra.mxu0 0.0
        %488 = vmatprep.subr.mxu0 0.0
        %489 = vmatpush1.msra.mxu0 0.0
        %490 = vmatprep.subr.mxu0 0.0
        %491 = vmatpush1.msra.mxu0 0.0
        %492 = vmatprep.subr.mxu0 0.0
        %493 = vmatpush1.msra.mxu0 0.0
        %494 = vmatprep.subr.mxu0 0.0
        %495 = vmatpush1.msra.mxu0 0.0
        %496 = vmatprep.subr.mxu0 0.0
        %497 = vmatpush1.msra.mxu0 0.0
        %498 = vmatprep.subr.mxu0 0.0
        %499 = vmatpush1.msra.mxu0 0.0
        %500 = vmatprep.subr.mxu0 0.0
        %501 = vmatpush1.msra.mxu0 0.0
        %502 = vmatprep.subr.mxu0 0.0
        %503 = vmatpush1.msra.mxu0 0.0
        %504 = vmatprep.subr.mxu0 0.0
        %505 = vmatpush1.msra.mxu0 0.0
        %506 = vmatprep.subr.mxu0 0.0
        %507 = vmatpush1.msra.mxu0 0.0
        %508 = vmatprep.subr.mxu0 0.0
        %509 = vmatpush1.msra.mxu0 0.0
        %510 = vmatprep.subr.mxu0 0.0
        %511 = vmatpush1.msra.mxu0 0.0
        %512 = vmatprep.subr.mxu0 0.0
        %513 = vmatpush1.msra.mxu0 0.0
        %514 = vmatprep.subr.mxu0 0.0
        %515 = vmatpush1.msra.mxu0 0.0
        %516 = vmatprep.subr.mxu0 0.0
        %517 = vmatpush1.msra.mxu0 0.0
        %518 = vmatprep.subr.mxu0 0.0
        %519 = vmatpush1.msra.mxu0 0.0
        %520 = vmatprep.subr.mxu0 0.0
        %521 = vmatpush1.msra.mxu0 0.0
        %522 = vmatprep.subr.mxu0 0.0
        %523 = vmatpush1.msra.mxu0 0.0
        %524 = vmatprep.subr.mxu0 0.0
        %525 = vmatpush1.msra.mxu0 0.0
        %526 = vmatprep.subr.mxu0 0.0
        %527 = vmatpush1.msra.mxu0 0.0
        %528 = vmatprep.subr.mxu0 0.0
        %529 = vmatpush1.msra.mxu0 0.0
        %530 = vmatprep.subr.mxu0 0.0
        %531 = vmatpush1.msra.mxu0 0.0
        %532 = vmatprep.subr.mxu0 0.0
        %533 = vmatpush1.msra.mxu0 0.0
        %534 = vmatprep.mubr.f32.mxu0 0.0
        %v535 = vand.u32 %v241, 4294901760
        %v536 = vsub.f32 %v241, %v535
        %v537 = vand.u32 %v536, 4294901760
        %538 = vmatmul.mubr.f32.gmra.mrb[0].mxu0 %v537
        %v539 = vpop.f32.mrb[0].mxu0
        %v540 = vadd.f32 %v466, %v539
        %v541 = vpop.f32.mrb[0].mxu0
        %542 = vdwg.mxu0
        %543 = vmatprep.subr.mxu0 0.0
        %v544 = vand.u32 %v238, 4294901760
        %v545 = vsub.f32 %v238, %v544
        %v546 = vand.u32 %v545, 4294901760
        %547 = vmatpush1.msra.mxu0 %v546
        %548 = vmatprep.subr.mxu0 0.0
        %549 = vmatpush1.msra.mxu0 0.0
        %550 = vmatprep.subr.mxu0 0.0
        %551 = vmatpush1.msra.mxu0 0.0
        %552 = vmatprep.subr.mxu0 0.0
        %553 = vmatpush1.msra.mxu0 0.0
        %554 = vmatprep.subr.mxu0 0.0
        %555 = vmatpush1.msra.mxu0 0.0
        %556 = vmatprep.subr.mxu0 0.0
        %557 = vmatpush1.msra.mxu0 0.0
        %558 = vmatprep.subr.mxu0 0.0
        %559 = vmatpush1.msra.mxu0 0.0
        %560 = vmatprep.subr.mxu0 0.0
        %561 = vmatpush1.msra.mxu0 0.0
        %562 = vmatprep.subr.mxu0 0.0
        %563 = vmatpush1.msra.mxu0 0.0
        %564 = vmatprep.subr.mxu0 0.0
        %565 = vmatpush1.msra.mxu0 0.0
        %566 = vmatprep.subr.mxu0 0.0
        %567 = vmatpush1.msra.mxu0 0.0
        %568 = vmatprep.subr.mxu0 0.0
        %569 = vmatpush1.msra.mxu0 0.0
        %570 = vmatprep.subr.mxu0 0.0
        %571 = vmatpush1.msra.mxu0 0.0
        %572 = vmatprep.subr.mxu0 0.0
        %573 = vmatpush1.msra.mxu0 0.0
        %574 = vmatprep.subr.mxu0 0.0
        %575 = vmatpush1.msra.mxu0 0.0
        %576 = vmatprep.subr.mxu0 0.0
        %577 = vmatpush1.msra.mxu0 0.0
        %578 = vmatprep.subr.mxu0 0.0
        %579 = vmatpush1.msra.mxu0 0.0
        %580 = vmatprep.subr.mxu0 0.0
        %581 = vmatpush1.msra.mxu0 0.0
        %582 = vmatprep.subr.mxu0 0.0
        %583 = vmatpush1.msra.mxu0 0.0
        %584 = vmatprep.subr.mxu0 0.0
        %585 = vmatpush1.msra.mxu0 0.0
        %586 = vmatprep.subr.mxu0 0.0
        %587 = vmatpush1.msra.mxu0 0.0
        %588 = vmatprep.subr.mxu0 0.0
        %589 = vmatpush1.msra.mxu0 0.0
        %590 = vmatprep.subr.mxu0 0.0
        %591 = vmatpush1.msra.mxu0 0.0
        %592 = vmatprep.subr.mxu0 0.0
        %593 = vmatpush1.msra.mxu0 0.0
        %594 = vmatprep.subr.mxu0 0.0
        %595 = vmatpush1.msra.mxu0 0.0
        %596 = vmatprep.subr.mxu0 0.0
        %597 = vmatpush1.msra.mxu0 0.0
        %598 = vmatprep.subr.mxu0 0.0
        %599 = vmatpush1.msra.mxu0 0.0
        %600 = vmatprep.subr.mxu0 0.0
        %601 = vmatpush1.msra.mxu0 0.0
        %602 = vmatprep.subr.mxu0 0.0
        %603 = vmatpush1.msra.mxu0 0.0
        %604 = vmatprep.subr.mxu0 0.0
        %605 = vmatpush1.msra.mxu0 0.0
        %606 = vmatprep.subr.mxu0 0.0
        %607 = vmatpush1.msra.mxu0 0.0
        %608 = vmatprep.subr.mxu0 0.0
        %609 = vmatpush1.msra.mxu0 0.0
        %610 = vmatprep.mubr.f32.mxu0 0.0
        %v611 = vand.u32 %v241, 4294901760
        %612 = vmatmul.mubr.f32.gmra.mrb[0].mxu0 %v611
        %v613 = vpop.f32.mrb[0].mxu0
        %v614 = vadd.f32 %v540, %v613
        %v615 = vpop.f32.mrb[0].mxu0
        %616 = vdwg.mxu0
        %617 = vmatprep.subr.mxu0 0.0
        %v618 = vand.u32 %v238, 4294901760
        %619 = vmatpush1.msra.mxu0 %v618
        %620 = vmatprep.subr.mxu0 0.0
        %621 = vmatpush1.msra.mxu0 0.0
        %622 = vmatprep.subr.mxu0 0.0
        %623 = vmatpush1.msra.mxu0 0.0
        %624 = vmatprep.subr.mxu0 0.0
        %625 = vmatpush1.msra.mxu0 0.0
        %626 = vmatprep.subr.mxu0 0.0
        %627 = vmatpush1.msra.mxu0 0.0
        %628 = vmatprep.subr.mxu0 0.0
        %629 = vmatpush1.msra.mxu0 0.0
        %630 = vmatprep.subr.mxu0 0.0
        %631 = vmatpush1.msra.mxu0 0.0
        %632 = vmatprep.subr.mxu0 0.0
        %633 = vmatpush1.msra.mxu0 0.0
        %634 = vmatprep.subr.mxu0 0.0
        %635 = vmatpush1.msra.mxu0 0.0
        %636 = vmatprep.subr.mxu0 0.0
        %637 = vmatpush1.msra.mxu0 0.0
        %638 = vmatprep.subr.mxu0 0.0
        %639 = vmatpush1.msra.mxu0 0.0
        %640 = vmatprep.subr.mxu0 0.0
        %641 = vmatpush1.msra.mxu0 0.0
        %642 = vmatprep.subr.mxu0 0.0
        %643 = vmatpush1.msra.mxu0 0.0
        %644 = vmatprep.subr.mxu0 0.0
        %645 = vmatpush1.msra.mxu0 0.0
        %646 = vmatprep.subr.mxu0 0.0
        %647 = vmatpush1.msra.mxu0 0.0
        %648 = vmatprep.subr.mxu0 0.0
        %649 = vmatpush1.msra.mxu0 0.0
        %650 = vmatprep.subr.mxu0 0.0
        %651 = vmatpush1.msra.mxu0 0.0
        %652 = vmatprep.subr.mxu0 0.0
        %653 = vmatpush1.msra.mxu0 0.0
        %654 = vmatprep.subr.mxu0 0.0
        %655 = vmatpush1.msra.mxu0 0.0
        %656 = vmatprep.subr.mxu0 0.0
        %657 = vmatpush1.msra.mxu0 0.0
        %658 = vmatprep.subr.mxu0 0.0
        %659 = vmatpush1.msra.mxu0 0.0
        %660 = vmatprep.subr.mxu0 0.0
        %661 = vmatpush1.msra.mxu0 0.0
        %662 = vmatprep.subr.mxu0 0.0
        %663 = vmatpush1.msra.mxu0 0.0
        %664 = vmatprep.subr.mxu0 0.0
        %665 = vmatpush1.msra.mxu0 0.0
        %666 = vmatprep.subr.mxu0 0.0
        %667 = vmatpush1.msra.mxu0 0.0
        %668 = vmatprep.subr.mxu0 0.0
        %669 = vmatpush1.msra.mxu0 0.0
        %670 = vmatprep.subr.mxu0 0.0
        %671 = vmatpush1.msra.mxu0 0.0
        %672 = vmatprep.subr.mxu0 0.0
        %673 = vmatpush1.msra.mxu0 0.0
        %674 = vmatprep.subr.mxu0 0.0
        %675 = vmatpush1.msra.mxu0 0.0
        %676 = vmatprep.subr.mxu0 0.0
        %677 = vmatpush1.msra.mxu0 0.0
        %678 = vmatprep.subr.mxu0 0.0
        %679 = vmatpush1.msra.mxu0 0.0
        %680 = vmatprep.subr.mxu0 0.0
        %681 = vmatpush1.msra.mxu0 0.0
        %682 = vmatprep.mubr.f32.mxu0 0.0
        %v683 = vand.u32 %v241, 4294901760
        %684 = vmatmul.mubr.f32.gmra.mrb[0].mxu0 %v683
        %v685 = vpop.f32.mrb[0].mxu0
        %v686 = vadd.f32 %v614, %v685
        %v687 = vpop.f32.mrb[0].mxu0
        %688 = vdwg.mxu0
        %v689 = vld [vmem:[%s2] sm:$0x1]
        %v691 = vlaneseq
        %v692 = vshrl.u32 %v691, 7
        %v693 = vsub.s32 0, %v692
        %v694 = vrot.slane %v689, %v693
        %v696 = vmul.f32 %v686, %v694
        %v697 = vld [vmem:[%s3] sm:$0x1]
        %v699 = vlaneseq
        %v700 = vshrl.u32 %v699, 7
        %v701 = vsub.s32 0, %v700
        %v702 = vrot.slane %v697, %v701
        %v704 = vadd.f32 %v696, %v702
        %v705 = vand.u32 2147483647, %v704
        %vm706 = vcmp.le.f32.partialorder %v705, 0.7853982
        %vm707 = vcmp.lt.s32.totalorder %v704, 0
        %v708 = vand.u32 %v704, 2139095040
        %v709 = vshrl.u32 %v708, 23
        %v710 = vsub.s32 %v709, 127
        %v711 = vand.u32 2147483647, %v704
        %v712 = vand.u32 %v711, 8388607
        %v713 = vor.u32 %v712, 8388608
        %v714 = vsub.s32 0, %v713
        %v715 = vadd.s32 %v710, 1
        %vm716 = vcmp.gt.s32.totalorder %v715, 0
        %v717 = vsel %vm716, %v715, 0
        %v718 = vshrl.u32 %v717, 5
        %v719 = vand.u32 %v717, 31
        %v720 = vsub.s32 32, %v719
        %v721 = vshrl.u32 683565275, %v720
        %v722 = vshll.u32 683565275, %v719
        %v723 = vshrl.u32 2475754826, %v720
        %v724 = vor.u32 %v722, %v723
        %v725 = vshll.u32 2475754826, %v719
        %v726 = vshrl.u32 2131351028, %v720
        %v727 = vor.u32 %v725, %v726
        %v728 = vshll.u32 2131351028, %v719
        %v729 = vshrl.u32 2102212464, %v720
        %v730 = vor.u32 %v728, %v729
        %v731 = vshll.u32 2102212464, %v719
        %v732 = vshrl.u32 920167782, %v720
        %v733 = vor.u32 %v731, %v732
        %v734 = vshll.u32 920167782, %v719
        %v735 = vshrl.u32 1326507024, %v720
        %v736 = vor.u32 %v734, %v735
        %vm737 = vcmp.lt.s32.totalorder %v718, 1
        %vm738 = vcmp.lt.s32.totalorder %v718, 2
        %vm739 = vcmp.lt.s32.totalorder %v718, 3
        %vm740 = vcmp.lt.s32.totalorder %v718, 4
        %v741 = vsel %vm737, %v721, %v724
        %v742 = vsel %vm740, %v730, 2102212464
        %v743 = vsel %vm739, %v727, %v742
        %v744 = vsel %vm738, %v741, %v743
        %v745 = vsel %vm737, %v724, %v727
        %v746 = vsel %vm740, %v733, 920167782
        %v747 = vsel %vm739, %v730, %v746
        %v748 = vsel %vm738, %v745, %v747
        %v749 = vsel %vm737, %v727, %v730
        %v750 = vsel %vm740, %v736, 1326507024
        %v751 = vsel %vm739, %v733, %v750
        %v752 = vsel %vm738, %v749, %v751
        %v753 = vshll.u32 %v713, 8
        %v754 = vmul.u32.u64.compose %v753, %v752
        %v755 = vextract.low.u32 %v754
        %v756 = vextract.high.u32 %v754
        %v757 = vmul.u32.u64.compose %v753, %v748
        %v758 = vextract.low.u32 %v757
        %v759 = vextract.high.u32 %v757
        %v760 = vmul.u32 %v753, %v744
        %v761 = vadd.s32 %v756, %v758
        %vm762 = vc.u32 %v756, %v758
        %v763 = vadd.s32 %v759, 1
        %v764 = vsel %vm762, %v763, %v759
        %v765 = vadd.s32 %v760, %v764
        %v766 = vadd.s32 %v765, 536870912
        %v767 = vshrl.u32 %v766, 30
        %v768 = vshll.u32 %v767, 30
        %v769 = vsub.s32 %v765, %v768
        %vm770 = vcmp.lt.s32.totalorder %v769, 0
        %v771 = vsub.s32 0, %v769
        %v772 = vsel %vm770, %v771, %v769
        %v773 = vclz %v772
        %v774 = vsub.s32 %v773, 2
        %vm775 = vcmp.gt.s32.totalorder 0, %v774
        %v776 = vsel %vm775, 0, %v774
        %v777 = vsub.s32 32, %v776
        %v778 = vshll.u32 %v769, %v776
        %v779 = vshrl.u32 %v761, %v777
        %v780 = vor.u32 %v778, %v779
        %v781 = vsub.s32 4294967266, %v776
        %v782 = vadd.s32 %v781, 127
        %v783 = vshll.u32 %v782, 23
        %v784 = vor.u32 4788187, %v783
        %v785 = vand.u32 2147483647, %v784
        %v787 = vcvt.s32.f32 %v780
        %v788 = vmul.f32 %v787, %v785
        %v789 = vxor.u32 %v788, 2147483648
        %v790 = vsel %vm707, %v789, %v788
        %v791 = vsub.s32 4, %v767
        %v792 = vsel %vm707, %v791, %v767
        %v793 = vsel %vm706, %v704, %v790
        %v794 = vsel %vm706, 0, %v792
        %v795 = vcosq.f32.pop %v793
        %v796 = vsinq.f32.pop %v793
        %vm797 = vweird.f32 %v704
        %v798 = vadd.s32 %v794, 3
        %v799 = vand.u32 %v798, 3
        %vm800 = vcmp.lt.s32.totalorder %v799, 2
        %vm801 = vcmp.eq.s32.totalorder %v799, 0
        %v802 = vxor.u32 %v796, 2147483648
        %v803 = vsel %vm801, %v795, %v802
        %vm804 = vcmp.eq.s32.totalorder %v799, 2
        %v805 = vxor.u32 %v795, 2147483648
        %v806 = vsel %vm804, %v805, %v796
        %v807 = vsel %vm800, %v803, %v806
        %v808 = vsel %vm797, nan, %v807
        %v809 = vmul.f32 %v808, 0.35355338
        %v810 = vld [vmem:[%s236] sm:$0xff]
        %v812 = vsel %vm239, %v810, 0
        %814 = vmatprep.subr.mxu0 0.0
        %v815 = vand.u32 %v238, 4294901760
        %816 = vmatpush1.msra.mxu0 %v815
        %817 = vmatprep.subr.mxu0 0.0
        %818 = vmatpush1.msra.mxu0 0.0
        %819 = vmatprep.subr.mxu0 0.0
        %820 = vmatpush1.msra.mxu0 0.0
        %821 = vmatprep.subr.mxu0 0.0
        %822 = vmatpush1.msra.mxu0 0.0
        %823 = vmatprep.subr.mxu0 0.0
        %824 = vmatpush1.msra.mxu0 0.0
        %825 = vmatprep.subr.mxu0 0.0
        %826 = vmatpush1.msra.mxu0 0.0
        %827 = vmatprep.subr.mxu0 0.0
        %828 = vmatpush1.msra.mxu0 0.0
        %829 = vmatprep.subr.mxu0 0.0
        %830 = vmatpush1.msra.mxu0 0.0
        %831 = vmatprep.subr.mxu0 0.0
        %832 = vmatpush1.msra.mxu0 0.0
        %833 = vmatprep.subr.mxu0 0.0
        %834 = vmatpush1.msra.mxu0 0.0
        %835 = vmatprep.subr.mxu0 0.0
        %836 = vmatpush1.msra.mxu0 0.0
        %837 = vmatprep.subr.mxu0 0.0
        %838 = vmatpush1.msra.mxu0 0.0
        %839 = vmatprep.subr.mxu0 0.0
        %840 = vmatpush1.msra.mxu0 0.0
        %841 = vmatprep.subr.mxu0 0.0
        %842 = vmatpush1.msra.mxu0 0.0
        %843 = vmatprep.subr.mxu0 0.0
        %844 = vmatpush1.msra.mxu0 0.0
        %845 = vmatprep.subr.mxu0 0.0
        %846 = vmatpush1.msra.mxu0 0.0
        %847 = vmatprep.subr.mxu0 0.0
        %848 = vmatpush1.msra.mxu0 0.0
        %849 = vmatprep.subr.mxu0 0.0
        %850 = vmatpush1.msra.mxu0 0.0
        %851 = vmatprep.subr.mxu0 0.0
        %852 = vmatpush1.msra.mxu0 0.0
        %853 = vmatprep.subr.mxu0 0.0
        %854 = vmatpush1.msra.mxu0 0.0
        %855 = vmatprep.subr.mxu0 0.0
        %856 = vmatpush1.msra.mxu0 0.0
        %857 = vmatprep.subr.mxu0 0.0
        %858 = vmatpush1.msra.mxu0 0.0
        %859 = vmatprep.subr.mxu0 0.0
        %860 = vmatpush1.msra.mxu0 0.0
        %861 = vmatprep.subr.mxu0 0.0
        %862 = vmatpush1.msra.mxu0 0.0
        %863 = vmatprep.subr.mxu0 0.0
        %864 = vmatpush1.msra.mxu0 0.0
        %865 = vmatprep.subr.mxu0 0.0
        %866 = vmatpush1.msra.mxu0 0.0
        %867 = vmatprep.subr.mxu0 0.0
        %868 = vmatpush1.msra.mxu0 0.0
        %869 = vmatprep.subr.mxu0 0.0
        %870 = vmatpush1.msra.mxu0 0.0
        %871 = vmatprep.subr.mxu0 0.0
        %872 = vmatpush1.msra.mxu0 0.0
        %873 = vmatprep.subr.mxu0 0.0
        %874 = vmatpush1.msra.mxu0 0.0
        %875 = vmatprep.subr.mxu0 0.0
        %876 = vmatpush1.msra.mxu0 0.0
        %877 = vmatprep.subr.mxu0 0.0
        %878 = vmatpush1.msra.mxu0 0.0
        %879 = vmatprep.mubr.f32.mxu0 0.0
        %v880 = vand.u32 %v812, 4294901760
        %v881 = vsub.f32 %v812, %v880
        %v882 = vand.u32 %v881, 4294901760
        %v883 = vsub.f32 %v881, %v882
        %v884 = vand.u32 %v883, 4294901760
        %885 = vmatmul.mubr.f32.gmra.mrb[0].mxu0 %v884
        %v886 = vpop.f32.mrb[0].mxu0
        %v887 = vadd.f32 0.0, %v886
        %v888 = vpop.f32.mrb[0].mxu0
        %889 = vdwg.mxu0
        %890 = vmatprep.subr.mxu0 0.0
        %v891 = vand.u32 %v238, 4294901760
        %v892 = vsub.f32 %v238, %v891
        %v893 = vand.u32 %v892, 4294901760
        %v894 = vsub.f32 %v892, %v893
        %v895 = vand.u32 %v894, 4294901760
        %896 = vmatpush1.msra.mxu0 %v895
        %897 = vmatprep.subr.mxu0 0.0
        %898 = vmatpush1.msra.mxu0 0.0
        %899 = vmatprep.subr.mxu0 0.0
        %900 = vmatpush1.msra.mxu0 0.0
        %901 = vmatprep.subr.mxu0 0.0
        %902 = vmatpush1.msra.mxu0 0.0
        %903 = vmatprep.subr.mxu0 0.0
        %904 = vmatpush1.msra.mxu0 0.0
        %905 = vmatprep.subr.mxu0 0.0
        %906 = vmatpush1.msra.mxu0 0.0
        %907 = vmatprep.subr.mxu0 0.0
        %908 = vmatpush1.msra.mxu0 0.0
        %909 = vmatprep.subr.mxu0 0.0
        %910 = vmatpush1.msra.mxu0 0.0
        %911 = vmatprep.subr.mxu0 0.0
        %912 = vmatpush1.msra.mxu0 0.0
        %913 = vmatprep.subr.mxu0 0.0
        %914 = vmatpush1.msra.mxu0 0.0
        %915 = vmatprep.subr.mxu0 0.0
        %916 = vmatpush1.msra.mxu0 0.0
        %917 = vmatprep.subr.mxu0 0.0
        %918 = vmatpush1.msra.mxu0 0.0
        %919 = vmatprep.subr.mxu0 0.0
        %920 = vmatpush1.msra.mxu0 0.0
        %921 = vmatprep.subr.mxu0 0.0
        %922 = vmatpush1.msra.mxu0 0.0
        %923 = vmatprep.subr.mxu0 0.0
        %924 = vmatpush1.msra.mxu0 0.0
        %925 = vmatprep.subr.mxu0 0.0
        %926 = vmatpush1.msra.mxu0 0.0
        %927 = vmatprep.subr.mxu0 0.0
        %928 = vmatpush1.msra.mxu0 0.0
        %929 = vmatprep.subr.mxu0 0.0
        %930 = vmatpush1.msra.mxu0 0.0
        %931 = vmatprep.subr.mxu0 0.0
        %932 = vmatpush1.msra.mxu0 0.0
        %933 = vmatprep.subr.mxu0 0.0
        %934 = vmatpush1.msra.mxu0 0.0
        %935 = vmatprep.subr.mxu0 0.0
        %936 = vmatpush1.msra.mxu0 0.0
        %937 = vmatprep.subr.mxu0 0.0
        %938 = vmatpush1.msra.mxu0 0.0
        %939 = vmatprep.subr.mxu0 0.0
        %940 = vmatpush1.msra.mxu0 0.0
        %941 = vmatprep.subr.mxu0 0.0
        %942 = vmatpush1.msra.mxu0 0.0
        %943 = vmatprep.subr.mxu0 0.0
        %944 = vmatpush1.msra.mxu0 0.0
        %945 = vmatprep.subr.mxu0 0.0
        %946 = vmatpush1.msra.mxu0 0.0
        %947 = vmatprep.subr.mxu0 0.0
        %948 = vmatpush1.msra.mxu0 0.0
        %949 = vmatprep.subr.mxu0 0.0
        %950 = vmatpush1.msra.mxu0 0.0
        %951 = vmatprep.subr.mxu0 0.0
        %952 = vmatpush1.msra.mxu0 0.0
        %953 = vmatprep.subr.mxu0 0.0
        %954 = vmatpush1.msra.mxu0 0.0
        %955 = vmatprep.subr.mxu0 0.0
        %956 = vmatpush1.msra.mxu0 0.0
        %957 = vmatprep.subr.mxu0 0.0
        %958 = vmatpush1.msra.mxu0 0.0
        %959 = vmatprep.mubr.f32.mxu0 0.0
        %v960 = vand.u32 %v812, 4294901760
        %961 = vmatmul.mubr.f32.gmra.mrb[0].mxu0 %v960
        %v962 = vpop.f32.mrb[0].mxu0
        %v963 = vadd.f32 %v887, %v962
        %v964 = vpop.f32.mrb[0].mxu0
        %965 = vdwg.mxu0
        %966 = vmatprep.subr.mxu0 0.0
        %v967 = vand.u32 %v238, 4294901760
        %v968 = vsub.f32 %v238, %v967
        %969 = vmatpush1.msra.mxu0 %v968
        %970 = vmatprep.subr.mxu0 0.0
        %971 = vmatpush1.msra.mxu0 0.0
        %972 = vmatprep.subr.mxu0 0.0
        %973 = vmatpush1.msra.mxu0 0.0
        %974 = vmatprep.subr.mxu0 0.0
        %975 = vmatpush1.msra.mxu0 0.0
        %976 = vmatprep.subr.mxu0 0.0
        %977 = vmatpush1.msra.mxu0 0.0
        %978 = vmatprep.subr.mxu0 0.0
        %979 = vmatpush1.msra.mxu0 0.0
        %980 = vmatprep.subr.mxu0 0.0
        %981 = vmatpush1.msra.mxu0 0.0
        %982 = vmatprep.subr.mxu0 0.0
        %983 = vmatpush1.msra.mxu0 0.0
        %984 = vmatprep.subr.mxu0 0.0
        %985 = vmatpush1.msra.mxu0 0.0
        %986 = vmatprep.subr.mxu0 0.0
        %987 = vmatpush1.msra.mxu0 0.0
        %988 = vmatprep.subr.mxu0 0.0
        %989 = vmatpush1.msra.mxu0 0.0
        %990 = vmatprep.subr.mxu0 0.0
        %991 = vmatpush1.msra.mxu0 0.0
        %992 = vmatprep.subr.mxu0 0.0
        %993 = vmatpush1.msra.mxu0 0.0
        %994 = vmatprep.subr.mxu0 0.0
        %995 = vmatpush1.msra.mxu0 0.0
        %996 = vmatprep.subr.mxu0 0.0
        %997 = vmatpush1.msra.mxu0 0.0
        %998 = vmatprep.subr.mxu0 0.0
        %999 = vmatpush1.msra.mxu0 0.0
        %1000 = vmatprep.subr.mxu0 0.0
        %1001 = vmatpush1.msra.mxu0 0.0
        %1002 = vmatprep.subr.mxu0 0.0
        %1003 = vmatpush1.msra.mxu0 0.0
        %1004 = vmatprep.subr.mxu0 0.0
        %1005 = vmatpush1.msra.mxu0 0.0
        %1006 = vmatprep.subr.mxu0 0.0
        %1007 = vmatpush1.msra.mxu0 0.0
        %1008 = vmatprep.subr.mxu0 0.0
        %1009 = vmatpush1.msra.mxu0 0.0
        %1010 = vmatprep.subr.mxu0 0.0
        %1011 = vmatpush1.msra.mxu0 0.0
        %1012 = vmatprep.subr.mxu0 0.0
        %1013 = vmatpush1.msra.mxu0 0.0
        %1014 = vmatprep.subr.mxu0 0.0
        %1015 = vmatpush1.msra.mxu0 0.0
        %1016 = vmatprep.subr.mxu0 0.0
        %1017 = vmatpush1.msra.mxu0 0.0
        %1018 = vmatprep.subr.mxu0 0.0
        %1019 = vmatpush1.msra.mxu0 0.0
        %1020 = vmatprep.subr.mxu0 0.0
        %1021 = vmatpush1.msra.mxu0 0.0
        %1022 = vmatprep.subr.mxu0 0.0
        %1023 = vmatpush1.msra.mxu0 0.0
        %1024 = vmatprep.subr.mxu0 0.0
        %1025 = vmatpush1.msra.mxu0 0.0
        %1026 = vmatprep.subr.mxu0 0.0
        %1027 = vmatpush1.msra.mxu0 0.0
        %1028 = vmatprep.subr.mxu0 0.0
        %1029 = vmatpush1.msra.mxu0 0.0
        %1030 = vmatprep.subr.mxu0 0.0
        %1031 = vmatpush1.msra.mxu0 0.0
        %1032 = vmatprep.mubr.f32.mxu0 0.0
        %v1033 = vand.u32 %v812, 4294901760
        %v1034 = vsub.f32 %v812, %v1033
        %1035 = vmatmul.mubr.f32.gmra.mrb[0].mxu0 %v1034
        %v1036 = vpop.f32.mrb[0].mxu0
        %v1037 = vadd.f32 %v963, %v1036
        %v1038 = vpop.f32.mrb[0].mxu0
        %1039 = vdwg.mxu0
        %1040 = vmatprep.subr.mxu0 0.0
        %v1041 = vand.u32 %v238, 4294901760
        %1042 = vmatpush1.msra.mxu0 %v1041
        %1043 = vmatprep.subr.mxu0 0.0
        %1044 = vmatpush1.msra.mxu0 0.0
        %1045 = vmatprep.subr.mxu0 0.0
        %1046 = vmatpush1.msra.mxu0 0.0
        %1047 = vmatprep.subr.mxu0 0.0
        %1048 = vmatpush1.msra.mxu0 0.0
        %1049 = vmatprep.subr.mxu0 0.0
        %1050 = vmatpush1.msra.mxu0 0.0
        %1051 = vmatprep.subr.mxu0 0.0
        %1052 = vmatpush1.msra.mxu0 0.0
        %1053 = vmatprep.subr.mxu0 0.0
        %1054 = vmatpush1.msra.mxu0 0.0
        %1055 = vmatprep.subr.mxu0 0.0
        %1056 = vmatpush1.msra.mxu0 0.0
        %1057 = vmatprep.subr.mxu0 0.0
        %1058 = vmatpush1.msra.mxu0 0.0
        %1059 = vmatprep.subr.mxu0 0.0
        %1060 = vmatpush1.msra.mxu0 0.0
        %1061 = vmatprep.subr.mxu0 0.0
        %1062 = vmatpush1.msra.mxu0 0.0
        %1063 = vmatprep.subr.mxu0 0.0
        %1064 = vmatpush1.msra.mxu0 0.0
        %1065 = vmatprep.subr.mxu0 0.0
        %1066 = vmatpush1.msra.mxu0 0.0
        %1067 = vmatprep.subr.mxu0 0.0
        %1068 = vmatpush1.msra.mxu0 0.0
        %1069 = vmatprep.subr.mxu0 0.0
        %1070 = vmatpush1.msra.mxu0 0.0
        %1071 = vmatprep.subr.mxu0 0.0
        %1072 = vmatpush1.msra.mxu0 0.0
        %1073 = vmatprep.subr.mxu0 0.0
        %1074 = vmatpush1.msra.mxu0 0.0
        %1075 = vmatprep.subr.mxu0 0.0
        %1076 = vmatpush1.msra.mxu0 0.0
        %1077 = vmatprep.subr.mxu0 0.0
        %1078 = vmatpush1.msra.mxu0 0.0
        %1079 = vmatprep.subr.mxu0 0.0
        %1080 = vmatpush1.msra.mxu0 0.0
        %1081 = vmatprep.subr.mxu0 0.0
        %1082 = vmatpush1.msra.mxu0 0.0
        %1083 = vmatprep.subr.mxu0 0.0
        %1084 = vmatpush1.msra.mxu0 0.0
        %1085 = vmatprep.subr.mxu0 0.0
        %1086 = vmatpush1.msra.mxu0 0.0
        %1087 = vmatprep.subr.mxu0 0.0
        %1088 = vmatpush1.msra.mxu0 0.0
        %1089 = vmatprep.subr.mxu0 0.0
        %1090 = vmatpush1.msra.mxu0 0.0
        %1091 = vmatprep.subr.mxu0 0.0
        %1092 = vmatpush1.msra.mxu0 0.0
        %1093 = vmatprep.subr.mxu0 0.0
        %1094 = vmatpush1.msra.mxu0 0.0
        %1095 = vmatprep.subr.mxu0 0.0
        %1096 = vmatpush1.msra.mxu0 0.0
        %1097 = vmatprep.subr.mxu0 0.0
        %1098 = vmatpush1.msra.mxu0 0.0
        %1099 = vmatprep.subr.mxu0 0.0
        %1100 = vmatpush1.msra.mxu0 0.0
        %1101 = vmatprep.subr.mxu0 0.0
        %1102 = vmatpush1.msra.mxu0 0.0
        %1103 = vmatprep.subr.mxu0 0.0
        %1104 = vmatpush1.msra.mxu0 0.0
        %1105 = vmatprep.mubr.f32.mxu0 0.0
        %v1106 = vand.u32 %v812, 4294901760
        %v1107 = vsub.f32 %v812, %v1106
        %v1108 = vand.u32 %v1107, 4294901760
        %1109 = vmatmul.mubr.f32.gmra.mrb[0].mxu0 %v1108
        %v1110 = vpop.f32.mrb[0].mxu0
        %v1111 = vadd.f32 %v1037, %v1110
        %v1112 = vpop.f32.mrb[0].mxu0
        %1113 = vdwg.mxu0
        %1114 = vmatprep.subr.mxu0 0.0
        %v1115 = vand.u32 %v238, 4294901760
        %v1116 = vsub.f32 %v238, %v1115
        %v1117 = vand.u32 %v1116, 4294901760
        %1118 = vmatpush1.msra.mxu0 %v1117
        %1119 = vmatprep.subr.mxu0 0.0
        %1120 = vmatpush1.msra.mxu0 0.0
        %1121 = vmatprep.subr.mxu0 0.0
        %1122 = vmatpush1.msra.mxu0 0.0
        %1123 = vmatprep.subr.mxu0 0.0
        %1124 = vmatpush1.msra.mxu0 0.0
        %1125 = vmatprep.subr.mxu0 0.0
        %1126 = vmatpush1.msra.mxu0 0.0
        %1127 = vmatprep.subr.mxu0 0.0
        %1128 = vmatpush1.msra.mxu0 0.0
        %1129 = vmatprep.subr.mxu0 0.0
        %1130 = vmatpush1.msra.mxu0 0.0
        %1131 = vmatprep.subr.mxu0 0.0
        %1132 = vmatpush1.msra.mxu0 0.0
        %1133 = vmatprep.subr.mxu0 0.0
        %1134 = vmatpush1.msra.mxu0 0.0
        %1135 = vmatprep.subr.mxu0 0.0
        %1136 = vmatpush1.msra.mxu0 0.0
        %1137 = vmatprep.subr.mxu0 0.0
        %1138 = vmatpush1.msra.mxu0 0.0
        %1139 = vmatprep.subr.mxu0 0.0
        %1140 = vmatpush1.msra.mxu0 0.0
        %1141 = vmatprep.subr.mxu0 0.0
        %1142 = vmatpush1.msra.mxu0 0.0
        %1143 = vmatprep.subr.mxu0 0.0
        %1144 = vmatpush1.msra.mxu0 0.0
        %1145 = vmatprep.subr.mxu0 0.0
        %1146 = vmatpush1.msra.mxu0 0.0
        %1147 = vmatprep.subr.mxu0 0.0
        %1148 = vmatpush1.msra.mxu0 0.0
        %1149 = vmatprep.subr.mxu0 0.0
        %1150 = vmatpush1.msra.mxu0 0.0
        %1151 = vmatprep.subr.mxu0 0.0
        %1152 = vmatpush1.msra.mxu0 0.0
        %1153 = vmatprep.subr.mxu0 0.0
        %1154 = vmatpush1.msra.mxu0 0.0
        %1155 = vmatprep.subr.mxu0 0.0
        %1156 = vmatpush1.msra.mxu0 0.0
        %1157 = vmatprep.subr.mxu0 0.0
        %1158 = vmatpush1.msra.mxu0 0.0
        %1159 = vmatprep.subr.mxu0 0.0
        %1160 = vmatpush1.msra.mxu0 0.0
        %1161 = vmatprep.subr.mxu0 0.0
        %1162 = vmatpush1.msra.mxu0 0.0
        %1163 = vmatprep.subr.mxu0 0.0
        %1164 = vmatpush1.msra.mxu0 0.0
        %1165 = vmatprep.subr.mxu0 0.0
        %1166 = vmatpush1.msra.mxu0 0.0
        %1167 = vmatprep.subr.mxu0 0.0
        %1168 = vmatpush1.msra.mxu0 0.0
        %1169 = vmatprep.subr.mxu0 0.0
        %1170 = vmatpush1.msra.mxu0 0.0
        %1171 = vmatprep.subr.mxu0 0.0
        %1172 = vmatpush1.msra.mxu0 0.0
        %1173 = vmatprep.subr.mxu0 0.0
        %1174 = vmatpush1.msra.mxu0 0.0
        %1175 = vmatprep.subr.mxu0 0.0
        %1176 = vmatpush1.msra.mxu0 0.0
        %1177 = vmatprep.subr.mxu0 0.0
        %1178 = vmatpush1.msra.mxu0 0.0
        %1179 = vmatprep.subr.mxu0 0.0
        %1180 = vmatpush1.msra.mxu0 0.0
        %1181 = vmatprep.mubr.f32.mxu0 0.0
        %v1182 = vand.u32 %v812, 4294901760
        %1183 = vmatmul.mubr.f32.gmra.mrb[0].mxu0 %v1182
        %v1184 = vpop.f32.mrb[0].mxu0
        %v1185 = vadd.f32 %v1111, %v1184
        %v1186 = vpop.f32.mrb[0].mxu0
        %1187 = vdwg.mxu0
        %1188 = vmatprep.subr.mxu0 0.0
        %v1189 = vand.u32 %v238, 4294901760
        %1190 = vmatpush1.msra.mxu0 %v1189
        %1191 = vmatprep.subr.mxu0 0.0
        %1192 = vmatpush1.msra.mxu0 0.0
        %1193 = vmatprep.subr.mxu0 0.0
        %1194 = vmatpush1.msra.mxu0 0.0
        %1195 = vmatprep.subr.mxu0 0.0
        %1196 = vmatpush1.msra.mxu0 0.0
        %1197 = vmatprep.subr.mxu0 0.0
        %1198 = vmatpush1.msra.mxu0 0.0
        %1199 = vmatprep.subr.mxu0 0.0
        %1200 = vmatpush1.msra.mxu0 0.0
        %1201 = vmatprep.subr.mxu0 0.0
        %1202 = vmatpush1.msra.mxu0 0.0
        %1203 = vmatprep.subr.mxu0 0.0
        %1204 = vmatpush1.msra.mxu0 0.0
        %1205 = vmatprep.subr.mxu0 0.0
        %1206 = vmatpush1.msra.mxu0 0.0
        %1207 = vmatprep.subr.mxu0 0.0
        %1208 = vmatpush1.msra.mxu0 0.0
        %1209 = vmatprep.subr.mxu0 0.0
        %1210 = vmatpush1.msra.mxu0 0.0
        %1211 = vmatprep.subr.mxu0 0.0
        %1212 = vmatpush1.msra.mxu0 0.0
        %1213 = vmatprep.subr.mxu0 0.0
        %1214 = vmatpush1.msra.mxu0 0.0
        %1215 = vmatprep.subr.mxu0 0.0
        %1216 = vmatpush1.msra.mxu0 0.0
        %1217 = vmatprep.subr.mxu0 0.0
        %1218 = vmatpush1.msra.mxu0 0.0
        %1219 = vmatprep.subr.mxu0 0.0
        %1220 = vmatpush1.msra.mxu0 0.0
        %1221 = vmatprep.subr.mxu0 0.0
        %1222 = vmatpush1.msra.mxu0 0.0
        %1223 = vmatprep.subr.mxu0 0.0
        %1224 = vmatpush1.msra.mxu0 0.0
        %1225 = vmatprep.subr.mxu0 0.0
        %1226 = vmatpush1.msra.mxu0 0.0
        %1227 = vmatprep.subr.mxu0 0.0
        %1228 = vmatpush1.msra.mxu0 0.0
        %1229 = vmatprep.subr.mxu0 0.0
        %1230 = vmatpush1.msra.mxu0 0.0
        %1231 = vmatprep.subr.mxu0 0.0
        %1232 = vmatpush1.msra.mxu0 0.0
        %1233 = vmatprep.subr.mxu0 0.0
        %1234 = vmatpush1.msra.mxu0 0.0
        %1235 = vmatprep.subr.mxu0 0.0
        %1236 = vmatpush1.msra.mxu0 0.0
        %1237 = vmatprep.subr.mxu0 0.0
        %1238 = vmatpush1.msra.mxu0 0.0
        %1239 = vmatprep.subr.mxu0 0.0
        %1240 = vmatpush1.msra.mxu0 0.0
        %1241 = vmatprep.subr.mxu0 0.0
        %1242 = vmatpush1.msra.mxu0 0.0
        %1243 = vmatprep.subr.mxu0 0.0
        %1244 = vmatpush1.msra.mxu0 0.0
        %1245 = vmatprep.subr.mxu0 0.0
        %1246 = vmatpush1.msra.mxu0 0.0
        %1247 = vmatprep.subr.mxu0 0.0
        %1248 = vmatpush1.msra.mxu0 0.0
        %1249 = vmatprep.subr.mxu0 0.0
        %1250 = vmatpush1.msra.mxu0 0.0
        %1251 = vmatprep.subr.mxu0 0.0
        %1252 = vmatpush1.msra.mxu0 0.0
        %1253 = vmatprep.mubr.f32.mxu0 0.0
        %v1254 = vand.u32 %v812, 4294901760
        %1255 = vmatmul.mubr.f32.gmra.mrb[0].mxu0 %v1254
        %v1256 = vpop.f32.mrb[0].mxu0
        %v1257 = vadd.f32 %v1185, %v1256
        %v1258 = vpop.f32.mrb[0].mxu0
        %1259 = vdwg.mxu0
        %v1260 = vmul.f32 %v809, %v1257
        %1261 = vst [vmem:[%s228] sm:$0xff] %v1260
        %s1262 = sand.u32 %s142, 1
        %s1263 = scalar_lea.sflag [#allocation3], %s1262
        %s1264 = sand.u32 %s142, 1
        %s1265 = smul.addr %s1264, 8
        %s1266 = scalar_lea.vmem [#allocation2], %s1265
        // Predicated region
        $region41: #{tpu_custom_call.1} parent=39 // pred_check
          %p1267 = pneg %p152
        $region42: #{tpu_custom_call.1} parent=39 // pred_check_branch
          %1269 = sbr.rel (%p1267) target = $region44
        $region43: #{tpu_custom_call.1} parent=39 // pred_region
          %s1271 = ssub.s32 128, 128
          %1272 = vsyncadd %s1263, %s1271
          %s1273 = smul.addr %s19, 128
          %s1274 = scalar_lea.hbm %s5, %s1273
          %s1276 = sshll.u32 %s1266, 4
          %s1277 = int_to_ptr.vmem [resolvable:$true] %s1276
          %1279 = dma.vmem_to_hbm [thread:$0]  %s1277, 128, %s1274, %s1263
        $region44: #{tpu_custom_call.1} parent=39 // pred_fallthru
          _
      $region40: #{tpu_custom_call.1} parent=5 // pred_fallthru
        _
      %p1280 = scmp.le.s32.totalorder 2, %s14
      // Predicated region
      $region45: #{tpu_custom_call.1} parent=5 // pred_check
        %p1281 = pneg %p1280
      $region46: #{tpu_custom_call.1} parent=5 // pred_check_branch
        %1283 = sbr.rel (%p1281) target = $region48
      $region47: #{tpu_custom_call.1} parent=5 // pred_region
        %s1284 = ssub.s32 %s14, 2
        // Predicated region
        $region49: #{tpu_custom_call.1} parent=47 // pred_check
          %p1285 = pneg %p158
        $region50: #{tpu_custom_call.1} parent=47 // pred_check_branch
          %1287 = sbr.rel (%p1285) target = $region52
        $region51: #{tpu_custom_call.1} parent=47 // pred_region
          %s1288 = sand.u32 %s143, 1
          %s1289 = scalar_lea.sflag [#allocation3], %s1288
          %s1290 = sand.u32 %s143, 1
          %s1291 = smul.addr %s1290, 8
          %s1292 = scalar_lea.vmem [#allocation2], %s1291
          %1293 = dma.done %s1289, 128
        $region52: #{tpu_custom_call.1} parent=47 // pred_fallthru
          _
      $region48: #{tpu_custom_call.1} parent=5 // pred_fallthru
        _
    $region6: #{tpu_custom_call.1} parent=1 // loop_footer
      %s18 = sadd.s32 1, %s14
    $region7: #{tpu_custom_call.1} parent=1 // loop_footer_branch
      %13 = sbr.rel target = $region3
    $region8: #{tpu_custom_call.1} parent=1 // loop_exit
      _
    %1294 = vsyncpa [#allocation3], 1
    %s1295 = scalar_lea.sflag [#allocation3], 1
    %1296 = vsyncpa %s1295, 1

</llo_original>
